<compile_context>
chip_gen: v7x
topology: tpu7x:2x2x1
jax: 0.10.0
libtpu: 0.0.40
codegen_flags: <defaults>
</compile_context>

<pallas_src>
import jax
import jax.numpy as jnp
from jax.experimental import pallas as pl
from jax.experimental.pallas import tpu as pltpu


def _round_up(v, m):
    return ((v + m - 1) // m) * m


def mlp_kernel(x_ref, w1_ref, b1_ref, w2_ref, b2_ref,
               w3_ref, b3_ref, w4_ref, b4_ref, o_ref):
    """Fused 4-layer MLP forward for one (TB, D) batch tile.

    x arrives f32 and is cast to bf16 in-kernel; w1..w3 are bf16 MXU inputs;
    biases and the (1, 64) w4 row are f32 (VPU math); all accumulation f32.
    Output is stored as a lane-dense (1, TB) row.
    """
    x = x_ref[...].astype(jnp.bfloat16)                        # (TB, D)

    h1 = jnp.dot(x, w1_ref[...],
                 preferred_element_type=jnp.float32) + b1_ref[...]
    h1 = jnp.maximum(h1, 0.0)                                  # (TB, 64) f32

    h2 = jnp.dot(h1.astype(jnp.bfloat16), w2_ref[...],
                 preferred_element_type=jnp.float32) + b2_ref[...]
    h2 = jnp.maximum(h2, 0.0)                                  # (TB, 128) f32

    h3 = jnp.dot(h2.astype(jnp.bfloat16), w3_ref[...],
                 preferred_element_type=jnp.float32) + b3_ref[...]
    h3 = jnp.maximum(h3, 0.0)                                  # (TB, 64) f32

    # Final 64 -> 1 layer off the MXU: VPU multiply against the (1, 64) w4
    # row, transpose through the (idle) XLU, reduce over sublanes -> a dense
    # (1, TB) row (no 1-of-128-lane masked stores).
    h3w = h3 * w4_ref[...]                                     # (TB, 64) f32
    row = jnp.sum(h3w.T, axis=0, keepdims=True) + b4_ref[...]  # (1, TB) f32
    o_ref[...] = row.astype(o_ref.dtype)


def mynn_forward(x, params, *, max_tile=2048):
    """Run the fused MLP kernel.

    x: (B, input_dim) float32
    params: dict with w1..w4 shaped (in, out) and b1..b4 shaped (1, out), f32.
    Returns (B, 1) float32.
    """
    B, D = x.shape

    # --- batch tiling ---------------------------------------------------
    if B <= 256:
        # Small batch: single tile, rounded up to a multiple of 128.
        TB = max(128, _round_up(B, 128))
        num_tiles = 1
    else:
        # Large batch: tiles of up to max_tile rows; keep the tile count
        # >= 2 and even so both v7x TensorCores get work (no-op elsewhere).
        num_tiles = max(2, pl.cdiv(B, max_tile))
        if num_tiles % 2:
            num_tiles += 1
        TB = _round_up(pl.cdiv(B, num_tiles), 256)
    B_pad = num_tiles * TB

    # x stays f32 (cast to bf16 inside the kernel); pad only if needed.
    x_in = x if B_pad == B else jnp.pad(x, ((0, B_pad - B), (0, 0)))

    # Weights: bf16 MXU inputs.  Biases and the w4 row stay f32.
    w1 = params["w1"].astype(jnp.bfloat16)                     # (D, 64)
    w2 = params["w2"].astype(jnp.bfloat16)                     # (64, 128)
    w3 = params["w3"].astype(jnp.bfloat16)                     # (128, 64)
    w4_row = params["w4"].T.astype(jnp.float32)                # (1, 64)
    b1 = params["b1"].astype(jnp.float32)                      # (1, 64)
    b2 = params["b2"].astype(jnp.float32)                      # (1, 128)
    b3 = params["b3"].astype(jnp.float32)                      # (1, 64)
    b4 = params["b4"].astype(jnp.float32)                      # (1, 1)

    in_specs = [
        # x streams tile-by-tile over the batch grid (auto double-buffered).
        pl.BlockSpec((TB, D), lambda i: (i, 0)),
        # Weights / biases: full-array blocks, constant maps -> VMEM-resident.
        pl.BlockSpec((D, 64), lambda i: (0, 0)),
        pl.BlockSpec((1, 64), lambda i: (0, 0)),
        pl.BlockSpec((64, 128), lambda i: (0, 0)),
        pl.BlockSpec((1, 128), lambda i: (0, 0)),
        pl.BlockSpec((128, 64), lambda i: (0, 0)),
        pl.BlockSpec((1, 64), lambda i: (0, 0)),
        pl.BlockSpec((1, 64), lambda i: (0, 0)),
        pl.BlockSpec((1, 1), lambda i: (0, 0)),
    ]
    # Lane-dense output: one (1, TB) row per grid step in a (1, B_pad) array.
    out_spec = pl.BlockSpec((1, TB), lambda i: (0, i))

    out = pl.pallas_call(
        mlp_kernel,
        out_shape=jax.ShapeDtypeStruct((1, B_pad), jnp.float32),
        grid=(num_tiles,),
        in_specs=in_specs,
        out_specs=out_spec,
        compiler_params=pltpu.CompilerParams(
            dimension_semantics=("parallel",)),
    )(x_in, w1, b1, w2, b2, w3, b3, w4_row, b4)

    return out[0, :B].reshape(B, 1)


def init_params(key, input_dim):
    """Deterministic init mimicking PyTorch nn.Linear default
    (U(-k, k), k = 1/sqrt(fan_in))."""
    dims = [(input_dim, 64), (64, 128), (128, 64), (64, 1)]
    params = {}
    for i, (fan_in, fan_out) in enumerate(dims, start=1):
        key, kw, kb = jax.random.split(key, 3)
        bound = 1.0 / jnp.sqrt(jnp.float32(fan_in))
        params[f"w{i}"] = jax.random.uniform(
            kw, (fan_in, fan_out), jnp.float32, minval=-bound, maxval=bound)
        params[f"b{i}"] = jax.random.uniform(
            kb, (1, fan_out), jnp.float32, minval=-bound, maxval=bound)
    return params


def reference_forward(x, params):
    """Reference with numerics matched to the kernel (bf16 MXU inputs,
    f32 accumulation / elementwise)."""
    bf = jnp.bfloat16
    h = jnp.dot(x.astype(bf), params["w1"].astype(bf),
                preferred_element_type=jnp.float32) + params["b1"]
    h = jnp.maximum(h, 0.0)
    h = jnp.dot(h.astype(bf), params["w2"].astype(bf),
                preferred_element_type=jnp.float32) + params["b2"]
    h = jnp.maximum(h, 0.0)
    h = jnp.dot(h.astype(bf), params["w3"].astype(bf),
                preferred_element_type=jnp.float32) + params["b3"]
    h = jnp.maximum(h, 0.0)
    return jnp.sum(h * params["w4"].T.astype(jnp.float32),
                   axis=-1, keepdims=True) + params["b4"]


if __name__ == "__main__":
    key = jax.random.PRNGKey(0)
    input_dim = 32
    batch = 8

    key, kx, kp = jax.random.split(key, 3)
    x = jax.random.normal(kx, (batch, input_dim), jnp.float32)
    params = init_params(kp, input_dim)

    out = mynn_forward(x, params)
    jax.block_until_ready(out)

    ref = reference_forward(x, params)
    assert out.shape == (batch, 1), out.shape
    assert jnp.allclose(out, ref, atol=1e-3, rtol=1e-3), "mismatch vs reference"

    print("KERNEL_OK")
</pallas_src>

<mosaic_0001>
module attributes {stable_mosaic.version = 11 : i64} {
  func.func @mlp_kernel(%arg0: i32, %arg1: memref<128x32xf32, #tpu.memory_space<vmem>>, %arg2: memref<32x64xbf16, #tpu.memory_space<vmem>>, %arg3: memref<1x64xf32, #tpu.memory_space<vmem>>, %arg4: memref<64x128xbf16, #tpu.memory_space<vmem>>, %arg5: memref<1x128xf32, #tpu.memory_space<vmem>>, %arg6: memref<128x64xbf16, #tpu.memory_space<vmem>>, %arg7: memref<1x64xf32, #tpu.memory_space<vmem>>, %arg8: memref<1x64xf32, #tpu.memory_space<vmem>>, %arg9: memref<1x1xf32, #tpu.memory_space<vmem>>, %arg10: memref<1x128xf32, #tpu.memory_space<vmem>>) attributes {dimension_semantics = [#tpu.dimension_semantics<parallel>], iteration_bounds = array<i64: 1>, scalar_prefetch = 0 : i64, scratch_operands = 0 : i64, tpu.core_type = #tpu.core_type<tc>, window_params = [{transform_indices = @transform_0, window_bounds = array<i64: 128, 32>}, {pipeline_mode = #tpu.pipeline_mode<synchronous>, transform_indices = @transform_1, window_bounds = array<i64: 32, 64>}, {pipeline_mode = #tpu.pipeline_mode<synchronous>, transform_indices = @transform_2, window_bounds = array<i64: 1, 64>}, {pipeline_mode = #tpu.pipeline_mode<synchronous>, transform_indices = @transform_3, window_bounds = array<i64: 64, 128>}, {pipeline_mode = #tpu.pipeline_mode<synchronous>, transform_indices = @transform_4, window_bounds = array<i64: 1, 128>}, {pipeline_mode = #tpu.pipeline_mode<synchronous>, transform_indices = @transform_5, window_bounds = array<i64: 128, 64>}, {pipeline_mode = #tpu.pipeline_mode<synchronous>, transform_indices = @transform_6, window_bounds = array<i64: 1, 64>}, {pipeline_mode = #tpu.pipeline_mode<synchronous>, transform_indices = @transform_7, window_bounds = array<i64: 1, 64>}, {pipeline_mode = #tpu.pipeline_mode<synchronous>, transform_indices = @transform_8, window_bounds = array<i64: 1, 1>}, {transform_indices = @transform_9, window_bounds = array<i64: 1, 128>}]} {
    %c0 = arith.constant 0 : index
    %c0_0 = arith.constant 0 : index
    %0 = vector.load %arg1[%c0, %c0_0] : memref<128x32xf32, #tpu.memory_space<vmem>>, vector<128x32xf32>
    %1 = arith.truncf %0 : vector<128x32xf32> to vector<128x32xbf16>
    %c0_1 = arith.constant 0 : index
    %c0_2 = arith.constant 0 : index
    %2 = vector.load %arg2[%c0_1, %c0_2] : memref<32x64xbf16, #tpu.memory_space<vmem>>, vector<32x64xbf16>
    %cst = arith.constant dense<0.000000e+00> : vector<128x64xf32>
    %3 = tpu.matmul %1, %2, %cst {dimension_numbers = #tpu.dot_dimension_numbers<[1], [0], [0], [1], [0, 0, 1, 1], [], []>} : vector<128x32xbf16>, vector<32x64xbf16>, vector<128x64xf32> -> vector<128x64xf32>
    %c0_3 = arith.constant 0 : index
    %c0_4 = arith.constant 0 : index
    %4 = vector.load %arg3[%c0_3, %c0_4] : memref<1x64xf32, #tpu.memory_space<vmem>>, vector<1x64xf32>
    %5 = vector.broadcast %4 : vector<1x64xf32> to vector<128x64xf32>
    %6 = arith.addf %3, %5 : vector<128x64xf32>
    %cst_5 = arith.constant 0.000000e+00 : f32
    %7 = vector.broadcast %cst_5 : f32 to vector<128x64xf32>
    %8 = arith.maximumf %6, %7 : vector<128x64xf32>
    %9 = arith.truncf %8 : vector<128x64xf32> to vector<128x64xbf16>
    %c0_6 = arith.constant 0 : index
    %c0_7 = arith.constant 0 : index
    %10 = vector.load %arg4[%c0_6, %c0_7] : memref<64x128xbf16, #tpu.memory_space<vmem>>, vector<64x128xbf16>
    %cst_8 = arith.constant dense<0.000000e+00> : vector<128x128xf32>
    %11 = tpu.matmul %9, %10, %cst_8 {dimension_numbers = #tpu.dot_dimension_numbers<[1], [0], [0], [1], [0, 0, 1, 1], [], []>} : vector<128x64xbf16>, vector<64x128xbf16>, vector<128x128xf32> -> vector<128x128xf32>
    %c0_9 = arith.constant 0 : index
    %c0_10 = arith.constant 0 : index
    %12 = vector.load %arg5[%c0_9, %c0_10] : memref<1x128xf32, #tpu.memory_space<vmem>>, vector<1x128xf32>
    %13 = vector.broadcast %12 : vector<1x128xf32> to vector<128x128xf32>
    %14 = arith.addf %11, %13 : vector<128x128xf32>
    %cst_11 = arith.constant 0.000000e+00 : f32
    %15 = vector.broadcast %cst_11 : f32 to vector<128x128xf32>
    %16 = arith.maximumf %14, %15 : vector<128x128xf32>
    %17 = arith.truncf %16 : vector<128x128xf32> to vector<128x128xbf16>
    %c0_12 = arith.constant 0 : index
    %c0_13 = arith.constant 0 : index
    %18 = vector.load %arg6[%c0_12, %c0_13] : memref<128x64xbf16, #tpu.memory_space<vmem>>, vector<128x64xbf16>
    %cst_14 = arith.constant dense<0.000000e+00> : vector<128x64xf32>
    %19 = tpu.matmul %17, %18, %cst_14 {dimension_numbers = #tpu.dot_dimension_numbers<[1], [0], [0], [1], [0, 0, 1, 1], [], []>} : vector<128x128xbf16>, vector<128x64xbf16>, vector<128x64xf32> -> vector<128x64xf32>
    %c0_15 = arith.constant 0 : index
    %c0_16 = arith.constant 0 : index
    %20 = vector.load %arg7[%c0_15, %c0_16] : memref<1x64xf32, #tpu.memory_space<vmem>>, vector<1x64xf32>
    %21 = vector.broadcast %20 : vector<1x64xf32> to vector<128x64xf32>
    %22 = arith.addf %19, %21 : vector<128x64xf32>
    %cst_17 = arith.constant 0.000000e+00 : f32
    %23 = vector.broadcast %cst_17 : f32 to vector<128x64xf32>
    %24 = arith.maximumf %22, %23 : vector<128x64xf32>
    %c0_18 = arith.constant 0 : index
    %c0_19 = arith.constant 0 : index
    %25 = vector.load %arg8[%c0_18, %c0_19] : memref<1x64xf32, #tpu.memory_space<vmem>>, vector<1x64xf32>
    %26 = vector.broadcast %25 : vector<1x64xf32> to vector<128x64xf32>
    %27 = arith.mulf %24, %26 : vector<128x64xf32>
    %28 = tpu.transpose %27, [1, 0] : vector<128x64xf32> -> vector<64x128xf32>
    %cst_20 = arith.constant dense<0.000000e+00> : vector<128xf32>
    %29 = vector.multi_reduction <add>, %28, %cst_20 [0] : vector<64x128xf32> to vector<128xf32>
    %30 = vector.shape_cast %29 : vector<128xf32> to vector<1x128xf32>
    %c0_21 = arith.constant 0 : index
    %c0_22 = arith.constant 0 : index
    %31 = vector.load %arg9[%c0_21, %c0_22] : memref<1x1xf32, #tpu.memory_space<vmem>>, vector<1x1xf32>
    %32 = vector.broadcast %31 : vector<1x1xf32> to vector<1x128xf32>
    %33 = arith.addf %30, %32 : vector<1x128xf32>
    %c0_23 = arith.constant 0 : index
    %c0_24 = arith.constant 0 : index
    %34 = vector.load %arg10[%c0_23, %c0_24] : memref<1x128xf32, #tpu.memory_space<vmem>>, vector<1x128xf32>
    tpu.vector_store %arg10[%c0_23, %c0_24], %33 {strides = array<i32>} : memref<1x128xf32, #tpu.memory_space<vmem>>, vector<1x128xf32>,
    return
  }
  func.func @transform_0(%arg0: i32) -> (i32, i32) {
    %c0_i32 = arith.constant 0 : i32
    %c0_i32_0 = arith.constant 0 : i32
    return %arg0, %c0_i32 : i32, i32
  }
  func.func @transform_1(%arg0: i32) -> (i32, i32) {
    %c0_i32 = arith.constant 0 : i32
    %c0_i32_0 = arith.constant 0 : i32
    %c0_i32_1 = arith.constant 0 : i32
    return %c0_i32, %c0_i32_0 : i32, i32
  }
  func.func @transform_2(%arg0: i32) -> (i32, i32) {
    %c0_i32 = arith.constant 0 : i32
    %c0_i32_0 = arith.constant 0 : i32
    %c0_i32_1 = arith.constant 0 : i32
    return %c0_i32, %c0_i32_0 : i32, i32
  }
  func.func @transform_3(%arg0: i32) -> (i32, i32) {
    %c0_i32 = arith.constant 0 : i32
    %c0_i32_0 = arith.constant 0 : i32
    %c0_i32_1 = arith.constant 0 : i32
    return %c0_i32, %c0_i32_0 : i32, i32
  }
  func.func @transform_4(%arg0: i32) -> (i32, i32) {
    %c0_i32 = arith.constant 0 : i32
    %c0_i32_0 = arith.constant 0 : i32
    %c0_i32_1 = arith.constant 0 : i32
    return %c0_i32, %c0_i32_0 : i32, i32
  }
  func.func @transform_5(%arg0: i32) -> (i32, i32) {
    %c0_i32 = arith.constant 0 : i32
    %c0_i32_0 = arith.constant 0 : i32
    %c0_i32_1 = arith.constant 0 : i32
    return %c0_i32, %c0_i32_0 : i32, i32
  }
  func.func @transform_6(%arg0: i32) -> (i32, i32) {
    %c0_i32 = arith.constant 0 : i32
    %c0_i32_0 = arith.constant 0 : i32
    %c0_i32_1 = arith.constant 0 : i32
    return %c0_i32, %c0_i32_0 : i32, i32
  }
  func.func @transform_7(%arg0: i32) -> (i32, i32) {
    %c0_i32 = arith.constant 0 : i32
    %c0_i32_0 = arith.constant 0 : i32
    %c0_i32_1 = arith.constant 0 : i32
    return %c0_i32, %c0_i32_0 : i32, i32
  }
  func.func @transform_8(%arg0: i32) -> (i32, i32) {
    %c0_i32 = arith.constant 0 : i32
    %c0_i32_0 = arith.constant 0 : i32
    %c0_i32_1 = arith.constant 0 : i32
    return %c0_i32, %c0_i32_0 : i32, i32
  }
  func.func @transform_9(%arg0: i32) -> (i32, i32) {
    %c0_i32 = arith.constant 0 : i32
    %c0_i32_0 = arith.constant 0 : i32
    return %c0_i32, %arg0 : i32, i32
  }
}

</mosaic_0001>

<llo_original>
// kernel: tpu_custom_call.1
$region0: #{tpu_custom_call.1}
  #allocation0 [shape = 'u32[]', space=smem, size = 0x4, offset = 0x4, fixed_abs, tag = 'smem constant byte address 0x4 - core index']
  #allocation1 [shape = 'u32[144,128]{1,0:T(1,128)}', space=vmem, size = 0x12000, scoped, tag = 'internal scratch']
  #allocation2 [shape = 'f32[1,1]{1,0:T(1,128)S(1)}', space=vmem, size = 0x200, scoped, tag = 'scoped memory for tpu_custom_call.1']
  %s0 = inlined_call_operand.vmem [shape: f32[128,32], index: 0, kind: input, shape index: {}]
  %s1 = inlined_call_operand.vmem [shape: bf16[32,64], index: 1, kind: input, shape index: {}]
  %s2 = inlined_call_operand.vmem [shape: f32[1,64], index: 2, kind: input, shape index: {}]
  %s3 = inlined_call_operand.vmem [shape: bf16[64,128], index: 3, kind: input, shape index: {}]
  %s4 = inlined_call_operand.vmem [shape: f32[1,128], index: 4, kind: input, shape index: {}]
  %s5 = inlined_call_operand.vmem [shape: bf16[128,64], index: 5, kind: input, shape index: {}]
  %s6 = inlined_call_operand.vmem [shape: f32[1,64], index: 6, kind: input, shape index: {}]
  %s7 = inlined_call_operand.vmem [shape: f32[1,64], index: 7, kind: input, shape index: {}]
  %s8 = inlined_call_operand.<no memory space> [shape: f32[1,1], index: 8, kind: input, shape index: {}]
  %s9 = inlined_call_operand.hbm [shape: f32[1,128], index: 9, kind: output, shape index: {}]
  %s10 = sld [smem:[#allocation0]]
  $region46: #{tpu_custom_call.1} parent=0
    _
  %s12 = ssub.s32 1, %s10
  %s13 = scalar_select 0, %s12, %s10
  %v14 = vstv %s8
  %15 = vst [vmem:[#allocation2] sm:$0x1] %v14
  $region1: #{tpu_custom_call.1} parent=0
    #allocation3 [shape = 'u8[512]{0}', space=vmem, size = 0x400, scoped, tag = 'output window, operand 0, single buffered']
    #allocation4 [shape = 's32[1]{0}', space=sflag, size = 0x4, scoped, tag = 'scoped memory for tpu_custom_call.1']
    %16 = vsyncpa [#allocation4], 0
    // Predicated region
    $region2: #{tpu_custom_call.1} parent=1 // pred_check
      _
    $region3: #{tpu_custom_call.1} parent=1 // pred_check_branch
      %18 = sbr.rel (0) target = $region5
    $region4: #{tpu_custom_call.1} parent=1 // pred_region
      _
    $region5: #{tpu_custom_call.1} parent=1 // pred_fallthru
      _
    // Predicated region
    $region6: #{tpu_custom_call.1} parent=1 // pred_check
      _
    $region7: #{tpu_custom_call.1} parent=1 // pred_check_branch
      %20 = sbr.rel (0) target = $region9
    $region8: #{tpu_custom_call.1} parent=1 // pred_region
      _
    $region9: #{tpu_custom_call.1} parent=1 // pred_fallthru
      _
    // Predicated region
    $region10: #{tpu_custom_call.1} parent=1 // pred_check
      _
    $region11: #{tpu_custom_call.1} parent=1 // pred_check_branch
      %22 = sbr.rel (0) target = $region13
    $region12: #{tpu_custom_call.1} parent=1 // pred_region
      _
    $region13: #{tpu_custom_call.1} parent=1 // pred_fallthru
      _
    // Predicated region
    $region14: #{tpu_custom_call.1} parent=1 // pred_check
      _
    $region15: #{tpu_custom_call.1} parent=1 // pred_check_branch
      %24 = sbr.rel (0) target = $region17
    $region16: #{tpu_custom_call.1} parent=1 // pred_region
      _
    $region17: #{tpu_custom_call.1} parent=1 // pred_fallthru
      _
    // Predicated region
    $region18: #{tpu_custom_call.1} parent=1 // pred_check
      _
    $region19: #{tpu_custom_call.1} parent=1 // pred_check_branch
      %26 = sbr.rel (0) target = $region21
    $region20: #{tpu_custom_call.1} parent=1 // pred_region
      _
    $region21: #{tpu_custom_call.1} parent=1 // pred_fallthru
      _
    // Predicated region
    $region22: #{tpu_custom_call.1} parent=1 // pred_check
      _
    $region23: #{tpu_custom_call.1} parent=1 // pred_check_branch
      %28 = sbr.rel (0) target = $region25
    $region24: #{tpu_custom_call.1} parent=1 // pred_region
      _
    $region25: #{tpu_custom_call.1} parent=1 // pred_fallthru
      _
    // Predicated region
    $region26: #{tpu_custom_call.1} parent=1 // pred_check
      _
    $region27: #{tpu_custom_call.1} parent=1 // pred_check_branch
      %30 = sbr.rel (0) target = $region29
    $region28: #{tpu_custom_call.1} parent=1 // pred_region
      _
    $region29: #{tpu_custom_call.1} parent=1 // pred_fallthru
      _
    // Predicated region
    $region30: #{tpu_custom_call.1} parent=1 // pred_check
      _
    $region31: #{tpu_custom_call.1} parent=1 // pred_check_branch
      %32 = sbr.rel (0) target = $region33
    $region32: #{tpu_custom_call.1} parent=1 // pred_region
      _
    $region33: #{tpu_custom_call.1} parent=1 // pred_fallthru
      _
    // Predicated region
    $region34: #{tpu_custom_call.1} parent=1 // pred_check
      _
    $region35: #{tpu_custom_call.1} parent=1 // pred_check_branch
      %34 = sbr.rel (0) target = $region37
    $region36: #{tpu_custom_call.1} parent=1 // pred_region
      _
    $region37: #{tpu_custom_call.1} parent=1 // pred_fallthru
      _
    %v36 = vld [vmem:[%s0] sm:$0xff]
    %v37 = vld [vmem:[%s0 + $0x8] sm:$0xff]
    %v38 = vld [vmem:[%s0 + $0x10] sm:$0xff]
    %v39 = vld [vmem:[%s0 + $0x18] sm:$0xff]
    %v40 = vld [vmem:[%s0 + $0x20] sm:$0xff]
    %v41 = vld [vmem:[%s0 + $0x28] sm:$0xff]
    %v42 = vld [vmem:[%s0 + $0x30] sm:$0xff]
    %v43 = vld [vmem:[%s0 + $0x38] sm:$0xff]
    %v44 = vld [vmem:[%s0 + $0x40] sm:$0xff]
    %v45 = vld [vmem:[%s0 + $0x48] sm:$0xff]
    %v46 = vld [vmem:[%s0 + $0x50] sm:$0xff]
    %v47 = vld [vmem:[%s0 + $0x58] sm:$0xff]
    %v48 = vld [vmem:[%s0 + $0x60] sm:$0xff]
    %v49 = vld [vmem:[%s0 + $0x68] sm:$0xff]
    %v50 = vld [vmem:[%s0 + $0x70] sm:$0xff]
    %v51 = vld [vmem:[%s0 + $0x78] sm:$0xff]
    %v52 = vpack.c.bf16 %v37, %v36
    %v53 = vpack.c.bf16 %v39, %v38
    %v54 = vpack.c.bf16 %v41, %v40
    %v55 = vpack.c.bf16 %v43, %v42
    %v56 = vpack.c.bf16 %v45, %v44
    %v57 = vpack.c.bf16 %v47, %v46
    %v58 = vpack.c.bf16 %v49, %v48
    %v59 = vpack.c.bf16 %v51, %v50
    %v60 = vld [vmem:[%s1] sm:$0xf]
    %v61 = vld [vmem:[%s1 + $0x4] sm:$0xf]
    %v62 = vld [vmem:[%s1 + $0x8] sm:$0xf]
    %v63 = vld [vmem:[%s1 + $0xc] sm:$0xf]
    %v64 = vld [vmem:[%s2] sm:$0x1]
    %v66 = vlaneseq
    %v67 = vshrl.u32 %v66, 7
    %v68 = vsub.s32 0, %v67
    %v69 = vrot.slane %v64, %v68
    %v75 = vunpack.c.l.b16 %v60
    %v76 = vunpack.c.l.b16 %v61
    %v77 = vunpack.c.l.b16 %v62
    %v78 = vunpack.c.l.b16 %v63
    %v79 = vpack.c.b16 %v76, %v75
    %v80 = vpack.c.b16 %v78, %v77
    %vm83 = vcmask 261120
    %v85 = vsel %vm83, %v52, 0
    %v88 = vsel %vm83, %v53, 0
    %v91 = vsel %vm83, %v54, 0
    %v94 = vsel %vm83, %v55, 0
    %v97 = vsel %vm83, %v56, 0
    %v100 = vsel %vm83, %v57, 0
    %v103 = vsel %vm83, %v58, 0
    %v106 = vsel %vm83, %v59, 0
    %108 = vmatprep.subr.bf16.mxu0 0
    %109 = vmatpush1.bf16.msra.mxu0 %v79
    %110 = vmatprep.subr.bf16.mxu0 0
    %111 = vmatpush1.bf16.msra.mxu0 %v80
    %112 = vmatprep.subr.bf16.mxu0 0
    %113 = vmatpush1.bf16.msra.mxu0 0
    %114 = vmatprep.subr.bf16.mxu0 0
    %115 = vmatpush1.bf16.msra.mxu0 0
    %116 = vmatprep.subr.bf16.mxu0 0
    %117 = vmatpush1.bf16.msra.mxu0 0
    %118 = vmatprep.subr.bf16.mxu0 0
    %119 = vmatpush1.bf16.msra.mxu0 0
    %120 = vmatprep.subr.bf16.mxu0 0
    %121 = vmatpush1.bf16.msra.mxu0 0
    %122 = vmatprep.subr.bf16.mxu0 0
    %123 = vmatpush1.bf16.msra.mxu0 0
    %124 = vmatprep.subr.bf16.mxu0 0
    %125 = vmatpush1.bf16.msra.mxu0 0
    %126 = vmatprep.subr.bf16.mxu0 0
    %127 = vmatpush1.bf16.msra.mxu0 0
    %128 = vmatprep.subr.bf16.mxu0 0
    %129 = vmatpush1.bf16.msra.mxu0 0
    %130 = vmatprep.subr.bf16.mxu0 0
    %131 = vmatpush1.bf16.msra.mxu0 0
    %132 = vmatprep.subr.bf16.mxu0 0
    %133 = vmatpush1.bf16.msra.mxu0 0
    %134 = vmatprep.subr.bf16.mxu0 0
    %135 = vmatpush1.bf16.msra.mxu0 0
    %136 = vmatprep.subr.bf16.mxu0 0
    %137 = vmatpush1.bf16.msra.mxu0 0
    %138 = vmatprep.subr.bf16.mxu0 0
    %139 = vmatpush1.bf16.msra.mxu0 0
    %140 = vmatprep.mubr.bf16.mxu0 0
    %141 = vmatmul.mubr.bf16.gmra.mrb[0].mxu0 %v85
    %v142 = vpop.f32.mrb[0].mxu0
    %v143 = vadd.f32 %v69, %v142
    %v144 = vpop.f32.mrb[0].mxu0
    %v145 = vpop.f32.mrb[0].mxu0
    %v146 = vadd.f32 %v69, %v145
    %v147 = vpop.f32.mrb[0].mxu0
    %148 = vmatprep.mubr.bf16.mxu0 0
    %149 = vmatmul.mubr.bf16.gmra.mrb[0].mxu0 %v88
    %v150 = vpop.f32.mrb[0].mxu0
    %v151 = vadd.f32 %v69, %v150
    %v152 = vpop.f32.mrb[0].mxu0
    %v153 = vpop.f32.mrb[0].mxu0
    %v154 = vadd.f32 %v69, %v153
    %v155 = vpop.f32.mrb[0].mxu0
    %156 = vmatprep.mubr.bf16.mxu0 0
    %157 = vmatmul.mubr.bf16.gmra.mrb[0].mxu0 %v91
    %v158 = vpop.f32.mrb[0].mxu0
    %v159 = vadd.f32 %v69, %v158
    %v160 = vpop.f32.mrb[0].mxu0
    %v161 = vpop.f32.mrb[0].mxu0
    %v162 = vadd.f32 %v69, %v161
    %v163 = vpop.f32.mrb[0].mxu0
    %164 = vmatprep.mubr.bf16.mxu0 0
    %165 = vmatmul.mubr.bf16.gmra.mrb[0].mxu0 %v94
    %v166 = vpop.f32.mrb[0].mxu0
    %v167 = vadd.f32 %v69, %v166
    %v168 = vpop.f32.mrb[0].mxu0
    %v169 = vpop.f32.mrb[0].mxu0
    %v170 = vadd.f32 %v69, %v169
    %v171 = vpop.f32.mrb[0].mxu0
    %172 = vmatprep.mubr.bf16.mxu0 0
    %173 = vmatmul.mubr.bf16.gmra.mrb[0].mxu0 %v97
    %v174 = vpop.f32.mrb[0].mxu0
    %v175 = vadd.f32 %v69, %v174
    %v176 = vpop.f32.mrb[0].mxu0
    %v177 = vpop.f32.mrb[0].mxu0
    %v178 = vadd.f32 %v69, %v177
    %v179 = vpop.f32.mrb[0].mxu0
    %180 = vmatprep.mubr.bf16.mxu0 0
    %181 = vmatmul.mubr.bf16.gmra.mrb[0].mxu0 %v100
    %v182 = vpop.f32.mrb[0].mxu0
    %v183 = vadd.f32 %v69, %v182
    %v184 = vpop.f32.mrb[0].mxu0
    %v185 = vpop.f32.mrb[0].mxu0
    %v186 = vadd.f32 %v69, %v185
    %v187 = vpop.f32.mrb[0].mxu0
    %188 = vmatprep.mubr.bf16.mxu0 0
    %189 = vmatmul.mubr.bf16.gmra.mrb[0].mxu0 %v103
    %v190 = vpop.f32.mrb[0].mxu0
    %v191 = vadd.f32 %v69, %v190
    %v192 = vpop.f32.mrb[0].mxu0
    %v193 = vpop.f32.mrb[0].mxu0
    %v194 = vadd.f32 %v69, %v193
    %v195 = vpop.f32.mrb[0].mxu0
    %196 = vmatprep.mubr.bf16.mxu0 0
    %197 = vmatmul.mubr.bf16.gmra.mrb[0].mxu0 %v106
    %v198 = vpop.f32.mrb[0].mxu0
    %v199 = vadd.f32 %v69, %v198
    %v200 = vpop.f32.mrb[0].mxu0
    %v201 = vpop.f32.mrb[0].mxu0
    %v202 = vadd.f32 %v69, %v201
    %v203 = vpop.f32.mrb[0].mxu0
    %204 = vdwg.mxu0
    %v205 = vmax.f32 %v143, 0.0
    %v206 = vmax.f32 %v146, 0.0
    %v207 = vmax.f32 %v151, 0.0
    %v208 = vmax.f32 %v154, 0.0
    %v209 = vmax.f32 %v159, 0.0
    %v210 = vmax.f32 %v162, 0.0
    %v211 = vmax.f32 %v167, 0.0
    %v212 = vmax.f32 %v170, 0.0
    %v213 = vmax.f32 %v175, 0.0
    %v214 = vmax.f32 %v178, 0.0
    %v215 = vmax.f32 %v183, 0.0
    %v216 = vmax.f32 %v186, 0.0
    %v217 = vmax.f32 %v191, 0.0
    %v218 = vmax.f32 %v194, 0.0
    %v219 = vmax.f32 %v199, 0.0
    %v220 = vmax.f32 %v202, 0.0
    %v221 = vpack.c.bf16 %v206, %v205
    %v222 = vpack.c.bf16 %v208, %v207
    %v223 = vpack.c.bf16 %v210, %v209
    %v224 = vpack.c.bf16 %v212, %v211
    %v225 = vpack.c.bf16 %v214, %v213
    %v226 = vpack.c.bf16 %v216, %v215
    %v227 = vpack.c.bf16 %v218, %v217
    %v228 = vpack.c.bf16 %v220, %v219
    %v229 = vld [vmem:[%s3] sm:$0xf]
    %v230 = vld [vmem:[%s3 + $0x4] sm:$0xf]
    %v231 = vld [vmem:[%s3 + $0x8] sm:$0xf]
    %v232 = vld [vmem:[%s3 + $0xc] sm:$0xf]
    %v233 = vld [vmem:[%s3 + $0x10] sm:$0xf]
    %v234 = vld [vmem:[%s3 + $0x14] sm:$0xf]
    %v235 = vld [vmem:[%s3 + $0x18] sm:$0xf]
    %v236 = vld [vmem:[%s3 + $0x1c] sm:$0xf]
    %v237 = vld [vmem:[%s4] sm:$0x1]
    %v239 = vlaneseq
    %v240 = vshrl.u32 %v239, 7
    %v241 = vsub.s32 0, %v240
    %v242 = vrot.slane %v237, %v241
    %v252 = vunpack.c.l.b16 %v229
    %v253 = vunpack.c.l.b16 %v230
    %v254 = vunpack.c.l.b16 %v231
    %v255 = vunpack.c.l.b16 %v232
    %v256 = vunpack.c.l.b16 %v233
    %v257 = vunpack.c.l.b16 %v234
    %v258 = vunpack.c.l.b16 %v235
    %v259 = vunpack.c.l.b16 %v236
    %v260 = vpack.c.b16 %v253, %v252
    %v261 = vpack.c.b16 %v255, %v254
    %v262 = vpack.c.b16 %v257, %v256
    %v263 = vpack.c.b16 %v259, %v258
    %vm268 = vcmask 523264
    %v270 = vsel %vm268, %v221, 0
    %v273 = vsel %vm268, %v222, 0
    %v276 = vsel %vm268, %v223, 0
    %v279 = vsel %vm268, %v224, 0
    %v282 = vsel %vm268, %v225, 0
    %v285 = vsel %vm268, %v226, 0
    %v288 = vsel %vm268, %v227, 0
    %v291 = vsel %vm268, %v228, 0
    %293 = vmatprep.subr.bf16.mxu0 0
    %294 = vmatpush1.bf16.msra.mxu0 %v260
    %295 = vmatprep.subr.bf16.mxu0 0
    %296 = vmatpush1.bf16.msra.mxu0 %v261
    %297 = vmatprep.subr.bf16.mxu0 0
    %298 = vmatpush1.bf16.msra.mxu0 %v262
    %299 = vmatprep.subr.bf16.mxu0 0
    %300 = vmatpush1.bf16.msra.mxu0 %v263
    %301 = vmatprep.subr.bf16.mxu0 0
    %302 = vmatpush1.bf16.msra.mxu0 0
    %303 = vmatprep.subr.bf16.mxu0 0
    %304 = vmatpush1.bf16.msra.mxu0 0
    %305 = vmatprep.subr.bf16.mxu0 0
    %306 = vmatpush1.bf16.msra.mxu0 0
    %307 = vmatprep.subr.bf16.mxu0 0
    %308 = vmatpush1.bf16.msra.mxu0 0
    %309 = vmatprep.subr.bf16.mxu0 0
    %310 = vmatpush1.bf16.msra.mxu0 0
    %311 = vmatprep.subr.bf16.mxu0 0
    %312 = vmatpush1.bf16.msra.mxu0 0
    %313 = vmatprep.subr.bf16.mxu0 0
    %314 = vmatpush1.bf16.msra.mxu0 0
    %315 = vmatprep.subr.bf16.mxu0 0
    %316 = vmatpush1.bf16.msra.mxu0 0
    %317 = vmatprep.subr.bf16.mxu0 0
    %318 = vmatpush1.bf16.msra.mxu0 0
    %319 = vmatprep.subr.bf16.mxu0 0
    %320 = vmatpush1.bf16.msra.mxu0 0
    %321 = vmatprep.subr.bf16.mxu0 0
    %322 = vmatpush1.bf16.msra.mxu0 0
    %323 = vmatprep.subr.bf16.mxu0 0
    %324 = vmatpush1.bf16.msra.mxu0 0
    %325 = vmatprep.mubr.bf16.mxu0 0
    %326 = vmatmul.mubr.bf16.gmra.mrb[0].mxu0 %v270
    %v327 = vpop.f32.mrb[0].mxu0
    %v328 = vadd.f32 %v242, %v327
    %v329 = vpop.f32.mrb[0].mxu0
    %v330 = vpop.f32.mrb[0].mxu0
    %v331 = vadd.f32 %v242, %v330
    %v332 = vpop.f32.mrb[0].mxu0
    %333 = vmatprep.mubr.bf16.mxu0 0
    %334 = vmatmul.mubr.bf16.gmra.mrb[0].mxu0 %v273
    %v335 = vpop.f32.mrb[0].mxu0
    %v336 = vadd.f32 %v242, %v335
    %v337 = vpop.f32.mrb[0].mxu0
    %v338 = vpop.f32.mrb[0].mxu0
    %v339 = vadd.f32 %v242, %v338
    %v340 = vpop.f32.mrb[0].mxu0
    %341 = vmatprep.mubr.bf16.mxu0 0
    %342 = vmatmul.mubr.bf16.gmra.mrb[0].mxu0 %v276
    %v343 = vpop.f32.mrb[0].mxu0
    %v344 = vadd.f32 %v242, %v343
    %v345 = vpop.f32.mrb[0].mxu0
    %v346 = vpop.f32.mrb[0].mxu0
    %v347 = vadd.f32 %v242, %v346
    %v348 = vpop.f32.mrb[0].mxu0
    %349 = vmatprep.mubr.bf16.mxu0 0
    %350 = vmatmul.mubr.bf16.gmra.mrb[0].mxu0 %v279
    %v351 = vpop.f32.mrb[0].mxu0
    %v352 = vadd.f32 %v242, %v351
    %v353 = vpop.f32.mrb[0].mxu0
    %v354 = vpop.f32.mrb[0].mxu0
    %v355 = vadd.f32 %v242, %v354
    %v356 = vpop.f32.mrb[0].mxu0
    %357 = vmatprep.mubr.bf16.mxu0 0
    %358 = vmatmul.mubr.bf16.gmra.mrb[0].mxu0 %v282
    %v359 = vpop.f32.mrb[0].mxu0
    %v360 = vadd.f32 %v242, %v359
    %v361 = vpop.f32.mrb[0].mxu0
    %v362 = vpop.f32.mrb[0].mxu0
    %v363 = vadd.f32 %v242, %v362
    %v364 = vpop.f32.mrb[0].mxu0
    %365 = vmatprep.mubr.bf16.mxu0 0
    %366 = vmatmul.mubr.bf16.gmra.mrb[0].mxu0 %v285
    %v367 = vpop.f32.mrb[0].mxu0
    %v368 = vadd.f32 %v242, %v367
    %v369 = vpop.f32.mrb[0].mxu0
    %v370 = vpop.f32.mrb[0].mxu0
    %v371 = vadd.f32 %v242, %v370
    %v372 = vpop.f32.mrb[0].mxu0
    %373 = vmatprep.mubr.bf16.mxu0 0
    %374 = vmatmul.mubr.bf16.gmra.mrb[0].mxu0 %v288
    %v375 = vpop.f32.mrb[0].mxu0
    %v376 = vadd.f32 %v242, %v375
    %v377 = vpop.f32.mrb[0].mxu0
    %v378 = vpop.f32.mrb[0].mxu0
    %v379 = vadd.f32 %v242, %v378
    %v380 = vpop.f32.mrb[0].mxu0
    %381 = vmatprep.mubr.bf16.mxu0 0
    %382 = vmatmul.mubr.bf16.gmra.mrb[0].mxu0 %v291
    %v383 = vpop.f32.mrb[0].mxu0
    %v384 = vadd.f32 %v242, %v383
    %v385 = vpop.f32.mrb[0].mxu0
    %v386 = vpop.f32.mrb[0].mxu0
    %v387 = vadd.f32 %v242, %v386
    %v388 = vpop.f32.mrb[0].mxu0
    %389 = vdwg.mxu0
    %v390 = vmax.f32 %v328, 0.0
    %v391 = vmax.f32 %v331, 0.0
    %v392 = vmax.f32 %v336, 0.0
    %v393 = vmax.f32 %v339, 0.0
    %v394 = vmax.f32 %v344, 0.0
    %v395 = vmax.f32 %v347, 0.0
    %v396 = vmax.f32 %v352, 0.0
    %v397 = vmax.f32 %v355, 0.0
    %v398 = vmax.f32 %v360, 0.0
    %v399 = vmax.f32 %v363, 0.0
    %v400 = vmax.f32 %v368, 0.0
    %v401 = vmax.f32 %v371, 0.0
    %v402 = vmax.f32 %v376, 0.0
    %v403 = vmax.f32 %v379, 0.0
    %v404 = vmax.f32 %v384, 0.0
    %v405 = vmax.f32 %v387, 0.0
    %v406 = vpack.c.bf16 %v391, %v390
    %v407 = vpack.c.bf16 %v393, %v392
    %v408 = vpack.c.bf16 %v395, %v394
    %v409 = vpack.c.bf16 %v397, %v396
    %v410 = vpack.c.bf16 %v399, %v398
    %v411 = vpack.c.bf16 %v401, %v400
    %v412 = vpack.c.bf16 %v403, %v402
    %v413 = vpack.c.bf16 %v405, %v404
    %v414 = vld [vmem:[%s5] sm:$0xf]
    %v415 = vld [vmem:[%s5 + $0x4] sm:$0xf]
    %v416 = vld [vmem:[%s5 + $0x8] sm:$0xf]
    %v417 = vld [vmem:[%s5 + $0xc] sm:$0xf]
    %v418 = vld [vmem:[%s5 + $0x10] sm:$0xf]
    %v419 = vld [vmem:[%s5 + $0x14] sm:$0xf]
    %v420 = vld [vmem:[%s5 + $0x18] sm:$0xf]
    %v421 = vld [vmem:[%s5 + $0x1c] sm:$0xf]
    %v422 = vld [vmem:[%s5 + $0x20] sm:$0xf]
    %v423 = vld [vmem:[%s5 + $0x24] sm:$0xf]
    %v424 = vld [vmem:[%s5 + $0x28] sm:$0xf]
    %v425 = vld [vmem:[%s5 + $0x2c] sm:$0xf]
    %v426 = vld [vmem:[%s5 + $0x30] sm:$0xf]
    %v427 = vld [vmem:[%s5 + $0x34] sm:$0xf]
    %v428 = vld [vmem:[%s5 + $0x38] sm:$0xf]
    %v429 = vld [vmem:[%s5 + $0x3c] sm:$0xf]
    %v430 = vld [vmem:[%s6] sm:$0x1]
    %v432 = vlaneseq
    %v433 = vshrl.u32 %v432, 7
    %v434 = vsub.s32 0, %v433
    %v435 = vrot.slane %v430, %v434
    %v453 = vunpack.c.l.b16 %v414
    %v454 = vunpack.c.l.b16 %v415
    %v455 = vunpack.c.l.b16 %v416
    %v456 = vunpack.c.l.b16 %v417
    %v457 = vunpack.c.l.b16 %v418
    %v458 = vunpack.c.l.b16 %v419
    %v459 = vunpack.c.l.b16 %v420
    %v460 = vunpack.c.l.b16 %v421
    %v461 = vunpack.c.l.b16 %v422
    %v462 = vunpack.c.l.b16 %v423
    %v463 = vunpack.c.l.b16 %v424
    %v464 = vunpack.c.l.b16 %v425
    %v465 = vunpack.c.l.b16 %v426
    %v466 = vunpack.c.l.b16 %v427
    %v467 = vunpack.c.l.b16 %v428
    %v468 = vunpack.c.l.b16 %v429
    %v469 = vpack.c.b16 %v454, %v453
    %v470 = vpack.c.b16 %v456, %v455
    %v471 = vpack.c.b16 %v458, %v457
    %v472 = vpack.c.b16 %v460, %v459
    %v473 = vpack.c.b16 %v462, %v461
    %v474 = vpack.c.b16 %v464, %v463
    %v475 = vpack.c.b16 %v466, %v465
    %v476 = vpack.c.b16 %v468, %v467
    %485 = vmatprep.subr.bf16.mxu0 0
    %486 = vmatpush1.bf16.msra.mxu0 %v469
    %487 = vmatprep.subr.bf16.mxu0 0
    %488 = vmatpush1.bf16.msra.mxu0 %v470
    %489 = vmatprep.subr.bf16.mxu0 0
    %490 = vmatpush1.bf16.msra.mxu0 %v471
    %491 = vmatprep.subr.bf16.mxu0 0
    %492 = vmatpush1.bf16.msra.mxu0 %v472
    %493 = vmatprep.subr.bf16.mxu0 0
    %494 = vmatpush1.bf16.msra.mxu0 %v473
    %495 = vmatprep.subr.bf16.mxu0 0
    %496 = vmatpush1.bf16.msra.mxu0 %v474
    %497 = vmatprep.subr.bf16.mxu0 0
    %498 = vmatpush1.bf16.msra.mxu0 %v475
    %499 = vmatprep.subr.bf16.mxu0 0
    %500 = vmatpush1.bf16.msra.mxu0 %v476
    %501 = vmatprep.subr.bf16.mxu0 0
    %502 = vmatpush1.bf16.msra.mxu0 0
    %503 = vmatprep.subr.bf16.mxu0 0
    %504 = vmatpush1.bf16.msra.mxu0 0
    %505 = vmatprep.subr.bf16.mxu0 0
    %506 = vmatpush1.bf16.msra.mxu0 0
    %507 = vmatprep.subr.bf16.mxu0 0
    %508 = vmatpush1.bf16.msra.mxu0 0
    %509 = vmatprep.subr.bf16.mxu0 0
    %510 = vmatpush1.bf16.msra.mxu0 0
    %511 = vmatprep.subr.bf16.mxu0 0
    %512 = vmatpush1.bf16.msra.mxu0 0
    %513 = vmatprep.subr.bf16.mxu0 0
    %514 = vmatpush1.bf16.msra.mxu0 0
    %515 = vmatprep.subr.bf16.mxu0 0
    %516 = vmatpush1.bf16.msra.mxu0 0
    %517 = vmatprep.mubr.bf16.mxu0 0
    %518 = vmatmul.mubr.bf16.gmra.mrb[0].mxu0 %v406
    %v519 = vpop.f32.mrb[0].mxu0
    %v520 = vadd.f32 %v435, %v519
    %v521 = vpop.f32.mrb[0].mxu0
    %v522 = vpop.f32.mrb[0].mxu0
    %v523 = vadd.f32 %v435, %v522
    %v524 = vpop.f32.mrb[0].mxu0
    %525 = vmatprep.mubr.bf16.mxu0 0
    %526 = vmatmul.mubr.bf16.gmra.mrb[0].mxu0 %v407
    %v527 = vpop.f32.mrb[0].mxu0
    %v528 = vadd.f32 %v435, %v527
    %v529 = vpop.f32.mrb[0].mxu0
    %v530 = vpop.f32.mrb[0].mxu0
    %v531 = vadd.f32 %v435, %v530
    %v532 = vpop.f32.mrb[0].mxu0
    %533 = vmatprep.mubr.bf16.mxu0 0
    %534 = vmatmul.mubr.bf16.gmra.mrb[0].mxu0 %v408
    %v535 = vpop.f32.mrb[0].mxu0
    %v536 = vadd.f32 %v435, %v535
    %v537 = vpop.f32.mrb[0].mxu0
    %v538 = vpop.f32.mrb[0].mxu0
    %v539 = vadd.f32 %v435, %v538
    %v540 = vpop.f32.mrb[0].mxu0
    %541 = vmatprep.mubr.bf16.mxu0 0
    %542 = vmatmul.mubr.bf16.gmra.mrb[0].mxu0 %v409
    %v543 = vpop.f32.mrb[0].mxu0
    %v544 = vadd.f32 %v435, %v543
    %v545 = vpop.f32.mrb[0].mxu0
    %v546 = vpop.f32.mrb[0].mxu0
    %v547 = vadd.f32 %v435, %v546
    %v548 = vpop.f32.mrb[0].mxu0
    %549 = vmatprep.mubr.bf16.mxu0 0
    %550 = vmatmul.mubr.bf16.gmra.mrb[0].mxu0 %v410
    %v551 = vpop.f32.mrb[0].mxu0
    %v552 = vadd.f32 %v435, %v551
    %v553 = vpop.f32.mrb[0].mxu0
    %v554 = vpop.f32.mrb[0].mxu0
    %v555 = vadd.f32 %v435, %v554
    %v556 = vpop.f32.mrb[0].mxu0
    %557 = vmatprep.mubr.bf16.mxu0 0
    %558 = vmatmul.mubr.bf16.gmra.mrb[0].mxu0 %v411
    %v559 = vpop.f32.mrb[0].mxu0
    %v560 = vadd.f32 %v435, %v559
    %v561 = vpop.f32.mrb[0].mxu0
    %v562 = vpop.f32.mrb[0].mxu0
    %v563 = vadd.f32 %v435, %v562
    %v564 = vpop.f32.mrb[0].mxu0
    %565 = vmatprep.mubr.bf16.mxu0 0
    %566 = vmatmul.mubr.bf16.gmra.mrb[0].mxu0 %v412
    %v567 = vpop.f32.mrb[0].mxu0
    %v568 = vadd.f32 %v435, %v567
    %v569 = vpop.f32.mrb[0].mxu0
    %v570 = vpop.f32.mrb[0].mxu0
    %v571 = vadd.f32 %v435, %v570
    %v572 = vpop.f32.mrb[0].mxu0
    %573 = vmatprep.mubr.bf16.mxu0 0
    %574 = vmatmul.mubr.bf16.gmra.mrb[0].mxu0 %v413
    %v575 = vpop.f32.mrb[0].mxu0
    %v576 = vadd.f32 %v435, %v575
    %v577 = vpop.f32.mrb[0].mxu0
    %v578 = vpop.f32.mrb[0].mxu0
    %v579 = vadd.f32 %v435, %v578
    %v580 = vpop.f32.mrb[0].mxu0
    %581 = vdwg.mxu0
    %v582 = vmax.f32 %v520, 0.0
    %v583 = vmax.f32 %v523, 0.0
    %v584 = vmax.f32 %v528, 0.0
    %v585 = vmax.f32 %v531, 0.0
    %v586 = vmax.f32 %v536, 0.0
    %v587 = vmax.f32 %v539, 0.0
    %v588 = vmax.f32 %v544, 0.0
    %v589 = vmax.f32 %v547, 0.0
    %v590 = vmax.f32 %v552, 0.0
    %v591 = vmax.f32 %v555, 0.0
    %v592 = vmax.f32 %v560, 0.0
    %v593 = vmax.f32 %v563, 0.0
    %v594 = vmax.f32 %v568, 0.0
    %v595 = vmax.f32 %v571, 0.0
    %v596 = vmax.f32 %v576, 0.0
    %v597 = vmax.f32 %v579, 0.0
    %v598 = vld [vmem:[%s7] sm:$0x1]
    %v600 = vlaneseq
    %v601 = vshrl.u32 %v600, 7
    %v602 = vsub.s32 0, %v601
    %v603 = vrot.slane %v598, %v602
    %v605 = vmul.f32 %v582, %v603
    %v606 = vmul.f32 %v583, %v603
    %v607 = vmul.f32 %v584, %v603
    %v608 = vmul.f32 %v585, %v603
    %v609 = vmul.f32 %v586, %v603
    %v610 = vmul.f32 %v587, %v603
    %v611 = vmul.f32 %v588, %v603
    %v612 = vmul.f32 %v589, %v603
    %v613 = vmul.f32 %v590, %v603
    %v614 = vmul.f32 %v591, %v603
    %v615 = vmul.f32 %v592, %v603
    %v616 = vmul.f32 %v593, %v603
    %v617 = vmul.f32 %v594, %v603
    %v618 = vmul.f32 %v595, %v603
    %v619 = vmul.f32 %v596, %v603
    %v620 = vmul.f32 %v597, %v603
    %621 = vxpose.xlu0.b32.start [1/16] %v605, 128
    %622 = vxpose.xlu0.b32.cont [2/16] %v606, 128
    %623 = vxpose.xlu0.b32.cont [3/16] %v607, 128
    %624 = vxpose.xlu0.b32.cont [4/16] %v608, 128
    %625 = vxpose.xlu0.b32.cont [5/16] %v609, 128
    %626 = vxpose.xlu0.b32.cont [6/16] %v610, 128
    %627 = vxpose.xlu0.b32.cont [7/16] %v611, 128
    %628 = vxpose.xlu0.b32.cont [8/16] %v612, 128
    %629 = vxpose.xlu0.b32.cont [9/16] %v613, 128
    %630 = vxpose.xlu0.b32.cont [10/16] %v614, 128
    %631 = vxpose.xlu0.b32.cont [11/16] %v615, 128
    %632 = vxpose.xlu0.b32.cont [12/16] %v616, 128
    %633 = vxpose.xlu0.b32.cont [13/16] %v617, 128
    %634 = vxpose.xlu0.b32.cont [14/16] %v618, 128
    %635 = vxpose.xlu0.b32.cont [15/16] %v619, 128
    %636 = vxpose.xlu0.b32.end [16/16] %v620, 128
    %v637 = vpop.trf.xlu0
    %v638 = vpop.trf.xlu0
    %v639 = vpop.trf.xlu0
    %v640 = vpop.trf.xlu0
    %v641 = vpop.trf.xlu0
    %v642 = vpop.trf.xlu0
    %v643 = vpop.trf.xlu0
    %v644 = vpop.trf.xlu0
    %v645 = vpop.trf.xlu0
    %v646 = vpop.trf.xlu0
    %v647 = vpop.trf.xlu0
    %v648 = vpop.trf.xlu0
    %v649 = vpop.trf.xlu0
    %v650 = vpop.trf.xlu0
    %v651 = vpop.trf.xlu0
    %v652 = vpop.trf.xlu0
    %v653 = vadd.f32 %v637, %v638
    %v654 = vadd.f32 %v653, %v639
    %v655 = vadd.f32 %v654, %v640
    %v656 = vadd.f32 %v655, %v641
    %v657 = vadd.f32 %v656, %v642
    %v658 = vadd.f32 %v657, %v643
    %v659 = vadd.f32 %v658, %v644
    %v660 = vrot.slane %v659, 4
    %v661 = vadd.f32 %v659, %v660
    %v662 = vrot.slane %v661, 2
    %v663 = vadd.f32 %v661, %v662
    %v664 = vrot.slane %v663, 1
    %v665 = vadd.f32 %v663, %v664
    %v666 = vld [vmem:[#allocation2] sm:$0x1]
    %668 = vset.pattern.permute.xlu0 0
    %669 = vperm.xlu0 %668, %v666
    %v670 = vpop.permute.xlu0 %669
    %v672 = vlaneseq
    %v673 = vshrl.u32 %v672, 7
    %v674 = vsub.s32 0, %v673
    %v675 = vrot.slane %v670, %v674
    %v676 = vadd.f32 %v665, %v675
    %677 = vst [vmem:[#allocation3] sm:$0x1] %v676
    // Predicated region
    $region38: #{tpu_custom_call.1} parent=1 // pred_check
      _
    $region39: #{tpu_custom_call.1} parent=1 // pred_check_branch
      %679 = sbr.rel (0) target = $region41
    $region40: #{tpu_custom_call.1} parent=1 // pred_region
      %s681 = ssub.s32 16, 16
      %682 = vsyncadd [#allocation4], %s681
      %s684 = sshll.u32 [#allocation3], 4
      %s685 = int_to_ptr.vmem [resolvable:$true] %s684
      %687 = dma.vmem_to_hbm [thread:$0]  %s685, 16, %s9, [#allocation4]
    $region41: #{tpu_custom_call.1} parent=1 // pred_fallthru
      _
    // Predicated region
    $region42: #{tpu_custom_call.1} parent=1 // pred_check
      _
    $region43: #{tpu_custom_call.1} parent=1 // pred_check_branch
      %689 = sbr.rel (0) target = $region45
    $region44: #{tpu_custom_call.1} parent=1 // pred_region
      %690 = dma.done [#allocation4], 16
    $region45: #{tpu_custom_call.1} parent=1 // pred_fallthru
      _
    %691 = vsyncpa [#allocation4], 1

</llo_original>
